<compile_context>
chip_gen: v7x
topology: tpu7x:2x2x1
jax: 0.10.0
libtpu: 0.0.40
codegen_flags: <defaults>
</compile_context>

<pallas_src>
import jax
import jax.numpy as jnp
from jax.experimental import pallas as pl
from jax.experimental.pallas import tpu as pltpu

ALPHA = 0.05                      # CornerResponseLayer(alpha=0.05) default
_LANES = 128
_SUBLANES = 8
_TARGET_ELEMS = 8192 * _LANES     # ~1M elems/channel/step (~4 MiB f32/channel)
_VMEM_LIMIT_BYTES = 48 << 20      # 2x(3+1)x4MiB pipeline buffers = 32 MiB << 48


def _cdiv(a: int, b: int) -> int:
    return -(-a // b)


def _round_up(a: int, m: int) -> int:
    return _cdiv(a, m) * m


def _largest_divisor_multiple_of(n: int, m: int, cap: int):
    """Largest d with d | n, d % m == 0, d <= cap; or None."""
    cap = min(cap, n)
    cap -= cap % m
    for d in range(cap, m - 1, -m):
        if n % d == 0:
            return d
    return None


def _make_kernel(alpha: float):
    def corner_response_kernel(x_ref, o_ref):
        # x_ref: (bn, 3, tr, tw)   o_ref: (bn, 1, tr, tw)
        sxx = x_ref[:, 0, :, :].astype(jnp.float32)
        syy = x_ref[:, 1, :, :].astype(jnp.float32)
        sxy = x_ref[:, 2, :, :].astype(jnp.float32)
        det = sxx * syy - sxy * sxy
        trace = sxx + syy
        r = det - alpha * (trace * trace)
        o_ref[:, 0, :, :] = r.astype(o_ref.dtype)

    return corner_response_kernel


def _run(x_in, *, out_shape, grid, in_block, out_block, alpha, nelems, itemsize):
    return pl.pallas_call(
        _make_kernel(alpha),
        out_shape=out_shape,
        grid_spec=pltpu.PrefetchScalarGridSpec(
            num_scalar_prefetch=0,
            grid=grid,
            in_specs=[pl.BlockSpec(in_block, lambda i, r: (i, 0, r, 0))],
            out_specs=pl.BlockSpec(out_block, lambda i, r: (i, 0, r, 0)),
        ),
        compiler_params=pltpu.CompilerParams(
            dimension_semantics=("parallel", "parallel"),
            vmem_limit_bytes=_VMEM_LIMIT_BYTES,
        ),
        cost_estimate=pl.CostEstimate(
            flops=7 * nelems,
            transcendentals=0,
            bytes_accessed=4 * nelems * itemsize,
        ),
    )(x_in)


def _corner_native(x, n, h, w, dtype, alpha, nelems, itemsize):
    """W is a multiple of 128: tile (N,3,H,W) directly, no reshape/pad."""
    if h * w <= _TARGET_ELEMS:
        th = h                                       # full extent: exempt from %8
        bn = max(1, min(n, _TARGET_ELEMS // (h * w)))
        grid_b, grid_r = _cdiv(n, bn), 1
        if grid_b == 1 and grid_r == 1:              # keep both v7x TCs busy
            if n >= 2:
                bn = _cdiv(n, 2)
                grid_b = _cdiv(n, bn)
            elif h > _SUBLANES:
                th = _round_up(_cdiv(h, 2), _SUBLANES)
                grid_r = _cdiv(h, th)
    else:
        bn, grid_b = 1, n
        cap = max(_SUBLANES, (_TARGET_ELEMS // w) - (_TARGET_ELEMS // w) % _SUBLANES)
        if h <= cap:
            th, grid_r = h, 1
        else:
            th = _largest_divisor_multiple_of(h, _SUBLANES, cap) or cap
            grid_r = _cdiv(h, th)

    return _run(
        x,
        out_shape=jax.ShapeDtypeStruct((n, 1, h, w), dtype),
        grid=(grid_b, grid_r),
        in_block=(bn, 3, th, w),
        out_block=(bn, 1, th, w),
        alpha=alpha, nelems=nelems, itemsize=itemsize,
    )


def _corner_slab(x, n, h, w, dtype, alpha, nelems, itemsize):
    """Generic path: lane-dense (rows,128) slab, pad only to a lane multiple."""
    L = h * w
    L_pad = _round_up(L, _LANES)
    rows = L_pad // _LANES

    xf = x.reshape(n, 3, L)
    if L_pad != L:
        xf = jnp.pad(xf, ((0, 0), (0, 0), (0, L_pad - L)))
    x4 = xf.reshape(n, 3, rows, _LANES)

    target_rows = _TARGET_ELEMS // _LANES
    if rows <= target_rows:
        tr = rows                                    # full extent: exempt from %8
        bn = max(1, min(n, target_rows // rows))
        grid_b, grid_r = _cdiv(n, bn), 1
        if grid_b == 1 and grid_r == 1:              # keep both v7x TCs busy
            if n >= 2:
                bn = _cdiv(n, 2)
                grid_b = _cdiv(n, bn)
            elif rows > _SUBLANES:
                tr = _round_up(_cdiv(rows, 2), _SUBLANES)
                grid_r = _cdiv(rows, tr)
    else:
        bn, grid_b = 1, n
        tr = _largest_divisor_multiple_of(rows, _SUBLANES, target_rows) or target_rows
        grid_r = _cdiv(rows, tr)

    out4 = _run(
        x4,
        out_shape=jax.ShapeDtypeStruct((n, 1, rows, _LANES), dtype),
        grid=(grid_b, grid_r),
        in_block=(bn, 3, tr, _LANES),
        out_block=(bn, 1, tr, _LANES),
        alpha=alpha, nelems=nelems, itemsize=itemsize,
    )

    out = out4.reshape(n, 1, L_pad)
    if L_pad != L:
        out = out[:, :, :L]
    return out.reshape(n, 1, h, w)


def corner_response(x: jax.Array, alpha: float = ALPHA) -> jax.Array:
    """x: (N, 3, H, W) -> (N, 1, H, W) Harris corner score R."""
    n, c, h, w = x.shape
    assert c == 3, "expected 3 channels (Sxx, Syy, Sxy)"
    dtype = x.dtype
    itemsize = jnp.dtype(dtype).itemsize
    nelems = n * h * w

    if w % _LANES == 0:
        return _corner_native(x, n, h, w, dtype, alpha, nelems, itemsize)
    return _corner_slab(x, n, h, w, dtype, alpha, nelems, itemsize)


def corner_response_ref(x: jax.Array, alpha: float = ALPHA) -> jax.Array:
    """Pure-JAX reference mirroring the PyTorch forward exactly."""
    sxx = x[:, 0:1, :, :]
    syy = x[:, 1:2, :, :]
    sxy = x[:, 2:3, :, :]
    det = sxx * syy - sxy * sxy
    trace = sxx + syy
    return det - alpha * (trace * trace)


if __name__ == "__main__":
    key = jax.random.PRNGKey(0)
    # module expects (num_image, 3, height, width)
    shapes = [
        (2, 3, 16, 16),    # slab path, H*W % 128 == 0 -> no padding at all
        (1, 3, 7, 13),     # slab path with lane padding (ragged H*W)
        (3, 3, 8, 128),    # native path (W % 128 == 0), partial batch block
    ]
    for s in shapes:
        key, sub = jax.random.split(key)
        x = jax.random.normal(sub, s, dtype=jnp.float32)
        out = jax.block_until_ready(corner_response(x))
        ref = corner_response_ref(x)
        assert out.shape == (s[0], 1, s[2], s[3]), out.shape
        assert jnp.allclose(out, ref, atol=1e-5, rtol=1e-5), f"mismatch vs reference for {s}"

    print("KERNEL_OK")
</pallas_src>

<mosaic_0001>
module attributes {stable_mosaic.version = 11 : i64} {
  func.func @corner_response_kernel(%arg0: i32, %arg1: i32, %arg2: memref<1x3x2x128xf32, #tpu.memory_space<vmem>>, %arg3: memref<1x1x2x128xf32, #tpu.memory_space<vmem>>) attributes {dimension_semantics = [#tpu.dimension_semantics<parallel>, #tpu.dimension_semantics<parallel>], iteration_bounds = array<i64: 2, 1>, scalar_prefetch = 0 : i64, scratch_operands = 0 : i64, tpu.core_type = #tpu.core_type<tc>, window_params = [{transform_indices = @transform_0, window_bounds = array<i64: 1, 3, 2, 128>}, {transform_indices = @transform_1, window_bounds = array<i64: 1, 1, 2, 128>}]} {
    %c0 = arith.constant 0 : index
    %c0_0 = arith.constant 0 : index
    %c0_1 = arith.constant 0 : index
    %c0_2 = arith.constant 0 : index
    %0 = vector.load %arg2[%c0, %c0_0, %c0_1, %c0_2] : memref<1x3x2x128xf32, #tpu.memory_space<vmem>>, vector<1x1x2x128xf32>
    %1 = vector.shape_cast %0 : vector<1x1x2x128xf32> to vector<1x2x128xf32>
    %c0_3 = arith.constant 0 : index
    %c1 = arith.constant 1 : index
    %c0_4 = arith.constant 0 : index
    %c0_5 = arith.constant 0 : index
    %2 = vector.load %arg2[%c0_3, %c1, %c0_4, %c0_5] : memref<1x3x2x128xf32, #tpu.memory_space<vmem>>, vector<1x1x2x128xf32>
    %3 = vector.shape_cast %2 : vector<1x1x2x128xf32> to vector<1x2x128xf32>
    %c0_6 = arith.constant 0 : index
    %c2 = arith.constant 2 : index
    %c0_7 = arith.constant 0 : index
    %c0_8 = arith.constant 0 : index
    %4 = vector.load %arg2[%c0_6, %c2, %c0_7, %c0_8] : memref<1x3x2x128xf32, #tpu.memory_space<vmem>>, vector<1x1x2x128xf32>
    %5 = vector.shape_cast %4 : vector<1x1x2x128xf32> to vector<1x2x128xf32>
    %6 = arith.mulf %1, %3 : vector<1x2x128xf32>
    %7 = arith.mulf %5, %5 : vector<1x2x128xf32>
    %8 = arith.subf %6, %7 : vector<1x2x128xf32>
    %9 = arith.addf %1, %3 : vector<1x2x128xf32>
    %10 = arith.mulf %9, %9 : vector<1x2x128xf32>
    %cst = arith.constant 5.000000e-02 : f32
    %11 = vector.broadcast %cst : f32 to vector<1x2x128xf32>
    %12 = arith.mulf %11, %10 : vector<1x2x128xf32>
    %13 = arith.subf %8, %12 : vector<1x2x128xf32>
    %c0_9 = arith.constant 0 : index
    %c0_10 = arith.constant 0 : index
    %c0_11 = arith.constant 0 : index
    %c0_12 = arith.constant 0 : index
    %14 = vector.load %arg3[%c0_9, %c0_10, %c0_11, %c0_12] : memref<1x1x2x128xf32, #tpu.memory_space<vmem>>, vector<1x1x2x128xf32>
    %15 = vector.shape_cast %14 : vector<1x1x2x128xf32> to vector<1x2x128xf32>
    %16 = vector.shape_cast %13 : vector<1x2x128xf32> to vector<1x1x2x128xf32>
    tpu.vector_store %arg3[%c0_9, %c0_10, %c0_11, %c0_12], %16 {strides = array<i32>} : memref<1x1x2x128xf32, #tpu.memory_space<vmem>>, vector<1x1x2x128xf32>,
    return
  }
  func.func @transform_0(%arg0: i32, %arg1: i32) -> (i32, i32, i32, i32) {
    %c0_i32 = arith.constant 0 : i32
    %c0_i32_0 = arith.constant 0 : i32
    %c0_i32_1 = arith.constant 0 : i32
    return %arg0, %c0_i32, %arg1, %c0_i32_0 : i32, i32, i32, i32
  }
  func.func @transform_1(%arg0: i32, %arg1: i32) -> (i32, i32, i32, i32) {
    %c0_i32 = arith.constant 0 : i32
    %c0_i32_0 = arith.constant 0 : i32
    %c0_i32_1 = arith.constant 0 : i32
    return %arg0, %c0_i32, %arg1, %c0_i32_0 : i32, i32, i32, i32
  }
}

</mosaic_0001>

<llo_original>
// kernel: tpu_custom_call.1
$region0: #{tpu_custom_call.1}
  #allocation0 [shape = 'u32[]', space=smem, size = 0x4, offset = 0x4, fixed_abs, tag = 'smem constant byte address 0x4 - core index']
  #allocation1 [shape = 'u32[144,128]{1,0:T(1,128)}', space=vmem, size = 0x12000, scoped, tag = 'internal scratch']
  %s0 = inlined_call_operand.hbm [shape: f32[2,3,2,128], index: 0, kind: input, shape index: {}]
  %s1 = inlined_call_operand.hbm [shape: f32[2,1,2,128], index: 1, kind: output, shape index: {}]
  %s2 = sld [smem:[#allocation0]]
  $region41: #{tpu_custom_call.1} parent=0
    _
  %s4 = ssub.s32 1, %s2
  %s5 = scalar_select 0, %s4, %s2
  $region1: #{tpu_custom_call.1} parent=0
    #allocation2 [shape = 'u8[6144]{0}', space=vmem, size = 0x1800, scoped, tag = 'input window, operand 0']
    #allocation3 [shape = 's32[2]{0}', space=sflag, size = 0x8, scoped, tag = 'scoped memory for tpu_custom_call.1']
    #allocation4 [shape = 's32[2]{0}', space=sflag, size = 0x8, scoped, tag = 'scoped memory for tpu_custom_call.1']
    #allocation5 [shape = 'u8[2048]{0}', space=vmem, size = 0x800, scoped, tag = 'output window, operand 0']
    %6 = vsyncpa [#allocation3], 0
    %s7 = scalar_lea.sflag [#allocation3], 1
    %8 = vsyncpa %s7, 0
    %9 = vsyncpa [#allocation4], 0
    %s10 = scalar_lea.sflag [#allocation4], 1
    %11 = vsyncpa %s10, 0
    loop: start=0, step=1, limit=4
    $region2: #{tpu_custom_call.1} parent=1 // loop_pre_header
      _
    $region3: #{tpu_custom_call.1} parent=1 // loop_header
      %s13 = sphi 0, %s17
      %p14 = scmp.ge.s32.totalorder %s13, 4
      %s20 = sphi 0, %s32
      %s21 = sphi 0, %s28
      %s22 = sphi 0, %s20
      %s23 = sphi 0, %s21
      %s24 = sphi 0, %s22
      %s25 = sphi 0, %s23
      %s37 = sphi 0, %s39
      %s40 = sphi 0, %s37
      %s41 = sphi 0, %s40
      %s57 = sphi 0, %s41
      %s65 = sphi 0, %s67
      %s68 = sphi 0, %s65
      %s69 = sphi 0, %s68
      %s85 = sphi 0, %s69
    $region4: #{tpu_custom_call.1} parent=1 // loop_header_branch
      %16 = sbr.rel (%p14) target = $region8
    $region5: #{tpu_custom_call.1} parent=1 // loop_body
      %s18 = ssub.s32 %s13, 1
      %s19 = ssub.s32 %s13, 2
      %s26 = sadd.s32 1, %s21
      %p27 = scmp.ge.s32.totalorder %s26, 1
      %s28 = scalar_select %p27, 0, %s26
      %s29 = sadd.s32 1, %s20
      %s30 = scalar_select %p27, %s29, %s20
      %p31 = scmp.ge.s32.totalorder %s30, 2
      %s32 = scalar_select %p31, 0, %s30
      %s33 = ssub.s32 %s20, %s32
      %s34 = ssub.s32 %s21, %s28
      %s35 = sor.u32 %s33, %s34
      %p36 = scmp.eq.s32.totalorder %s35, 0
      %s38 = sadd.s32 %s37, 1
      %s39 = scalar_select %p36, %s37, %s38
      %p42 = pneg %p36
      %p43 = scmp.eq.s32.totalorder %s13, 1
      %p44 = por %p42, %p43
      %p45 = scmp.ne.s32.totalorder %s37, %s40
      %p46 = scmp.eq.s32.totalorder %s13, 0
      %p47 = por %p45, %p46
      %p48 = scmp.ne.s32.totalorder %s37, %s40
      %p49 = scmp.eq.s32.totalorder %s18, 1
      %p50 = por %p48, %p49
      %p51 = scmp.ne.s32.totalorder %s40, %s41
      %p52 = scmp.eq.s32.totalorder %s18, 0
      %p53 = por %p51, %p52
      %p54 = scmp.ne.s32.totalorder %s40, %s41
      %p55 = scmp.eq.s32.totalorder %s19, 1
      %p56 = por %p54, %p55
      %p58 = scmp.ne.s32.totalorder %s41, %s57
      %p59 = scmp.eq.s32.totalorder %s19, 0
      %p60 = por %p58, %p59
      %s61 = ssub.s32 %s20, %s32
      %s62 = ssub.s32 %s21, %s28
      %s63 = sor.u32 %s61, %s62
      %p64 = scmp.eq.s32.totalorder %s63, 0
      %s66 = sadd.s32 %s65, 1
      %s67 = scalar_select %p64, %s65, %s66
      %p70 = pneg %p64
      %p71 = scmp.eq.s32.totalorder %s13, 1
      %p72 = por %p70, %p71
      %p73 = scmp.ne.s32.totalorder %s65, %s68
      %p74 = scmp.eq.s32.totalorder %s13, 0
      %p75 = por %p73, %p74
      %p76 = scmp.ne.s32.totalorder %s65, %s68
      %p77 = scmp.eq.s32.totalorder %s18, 1
      %p78 = por %p76, %p77
      %p79 = scmp.ne.s32.totalorder %s68, %s69
      %p80 = scmp.eq.s32.totalorder %s18, 0
      %p81 = por %p79, %p80
      %p82 = scmp.ne.s32.totalorder %s68, %s69
      %p83 = scmp.eq.s32.totalorder %s19, 1
      %p84 = por %p82, %p83
      %p86 = scmp.ne.s32.totalorder %s69, %s85
      %p87 = scmp.eq.s32.totalorder %s19, 0
      %p88 = por %p86, %p87
      %p89 = scmp.le.s32.totalorder 1, %s13
      %p90 = scmp.lt.s32.totalorder %s13, 3
      %p91 = pnand %p89, %p90
      %p92 = pneg %p91
      // Predicated region
      $region9: #{tpu_custom_call.1} parent=5 // pred_check
        _
      $region10: #{tpu_custom_call.1} parent=5 // pred_check_branch
        %94 = sbr.rel (%p91) target = $region12
      $region11: #{tpu_custom_call.1} parent=5 // pred_region
        %s95 = ssub.s32 %s13, 1
      $region12: #{tpu_custom_call.1} parent=5 // pred_fallthru
        _
      %p96 = scmp.lt.s32.totalorder %s13, 2
      // Predicated region
      $region13: #{tpu_custom_call.1} parent=5 // pred_check
        %p97 = pneg %p96
      $region14: #{tpu_custom_call.1} parent=5 // pred_check_branch
        %99 = sbr.rel (%p97) target = $region16
      $region15: #{tpu_custom_call.1} parent=5 // pred_region
        // Predicated region
        $region17: #{tpu_custom_call.1} parent=15 // pred_check
          %p100 = pneg %p47
        $region18: #{tpu_custom_call.1} parent=15 // pred_check_branch
          %102 = sbr.rel (%p100) target = $region20
        $region19: #{tpu_custom_call.1} parent=15 // pred_region
          %s103 = sand.u32 %s37, 1
          %s104 = scalar_lea.sflag [#allocation3], %s103
          %s105 = sand.u32 %s37, 1
          %s106 = smul.addr %s105, 6
          %s107 = scalar_lea.vmem [#allocation2], %s106
          %s109 = ssub.s32 96, 96
          %110 = vsyncadd %s104, %s109
          %s111 = smul.addr %s20, 3
          %s112 = sadd.s32 %s21, %s111
          %s113 = smul.addr %s112, 32
          %s114 = scalar_lea.hbm %s0, %s113
          %s115 = sshll.u32 %s107, 4
          %s116 = int_to_ptr.vmem [resolvable:$true] %s115
          %121 = dma.hbm_to_vmem [thread:$0]  %s114, 96, %s116, %s104, 32, 32, 2
        $region20: #{tpu_custom_call.1} parent=15 // pred_fallthru
          _
      $region16: #{tpu_custom_call.1} parent=5 // pred_fallthru
        _
      %p122 = scmp.le.s32.totalorder 1, %s13
      %p123 = scmp.lt.s32.totalorder %s13, 3
      %p124 = pnand %p122, %p123
      %p125 = pneg %p124
      // Predicated region
      $region21: #{tpu_custom_call.1} parent=5 // pred_check
        _
      $region22: #{tpu_custom_call.1} parent=5 // pred_check_branch
        %127 = sbr.rel (%p124) target = $region24
      $region23: #{tpu_custom_call.1} parent=5 // pred_region
        %s128 = ssub.s32 %s13, 1
        %s129 = sand.u32 %s40, 1
        %s130 = scalar_lea.sflag [#allocation3], %s129
        %s131 = sand.u32 %s40, 1
        %s132 = smul.addr %s131, 6
        %s133 = scalar_lea.vmem [#allocation2], %s132
        // Predicated region
        $region25: #{tpu_custom_call.1} parent=23 // pred_check
          %p134 = pneg %p53
        $region26: #{tpu_custom_call.1} parent=23 // pred_check_branch
          %136 = sbr.rel (%p134) target = $region28
        $region27: #{tpu_custom_call.1} parent=23 // pred_region
          %137 = dma.done %s130, 96
        $region28: #{tpu_custom_call.1} parent=23 // pred_fallthru
          _
        %s138 = sand.u32 %s40, 1
        %s139 = scalar_lea.sflag [#allocation3], %s138
        %s140 = sand.u32 %s40, 1
        %s141 = smul.addr %s140, 6
        %s142 = scalar_lea.vmem [#allocation2], %s141
        %p143 = pneg %p53
        %p144 = pneg %p50
        %p145 = pneg %p81
        %p146 = pneg %p78
        %s147 = sand.u32 %s68, 1
        %s148 = scalar_lea.sflag [#allocation4], %s147
        %s149 = sand.u32 %s68, 1
        %s150 = smul.addr %s149, 2
        %s151 = scalar_lea.vmem [#allocation5], %s150
        %v152 = vld [vmem:[%s133] sm:$0x3]
        %s153 = scalar_lea.vmem %s133, 2 [#allocation2]
        %v154 = vld [vmem:[%s153] sm:$0x3]
        %s155 = scalar_lea.vmem %s133, 4 [#allocation2]
        %v156 = vld [vmem:[%s155] sm:$0x3]
        %v157 = vmul.f32 %v152, %v154
        %v158 = vmul.f32 %v156, %v156
        %v159 = vsub.f32 %v157, %v158
        %v160 = vadd.f32 %v152, %v154
        %v161 = vmul.f32 %v160, %v160
        %v162 = vmul.f32 %v161, 0.05
        %v163 = vsub.f32 %v159, %v162
        %164 = vst [vmem:[%s151] sm:$0x3] %v163
        %s165 = sand.u32 %s68, 1
        %s166 = scalar_lea.sflag [#allocation4], %s165
        %s167 = sand.u32 %s68, 1
        %s168 = smul.addr %s167, 2
        %s169 = scalar_lea.vmem [#allocation5], %s168
        // Predicated region
        $region29: #{tpu_custom_call.1} parent=23 // pred_check
          %p170 = pneg %p78
        $region30: #{tpu_custom_call.1} parent=23 // pred_check_branch
          %172 = sbr.rel (%p170) target = $region32
        $region31: #{tpu_custom_call.1} parent=23 // pred_region
          %s174 = ssub.s32 32, 32
          %175 = vsyncadd %s166, %s174
          %s176 = sadd.s32 %s23, %s22
          %s177 = smul.addr %s176, 32
          %s178 = scalar_lea.hbm %s1, %s177
          %s180 = sshll.u32 %s169, 4
          %s181 = int_to_ptr.vmem [resolvable:$true] %s180
          %183 = dma.vmem_to_hbm [thread:$0]  %s181, 32, %s178, %s166
        $region32: #{tpu_custom_call.1} parent=23 // pred_fallthru
          _
      $region24: #{tpu_custom_call.1} parent=5 // pred_fallthru
        _
      %p184 = scmp.le.s32.totalorder 2, %s13
      // Predicated region
      $region33: #{tpu_custom_call.1} parent=5 // pred_check
        %p185 = pneg %p184
      $region34: #{tpu_custom_call.1} parent=5 // pred_check_branch
        %187 = sbr.rel (%p185) target = $region36
      $region35: #{tpu_custom_call.1} parent=5 // pred_region
        %s188 = ssub.s32 %s13, 2
        // Predicated region
        $region37: #{tpu_custom_call.1} parent=35 // pred_check
          %p189 = pneg %p84
        $region38: #{tpu_custom_call.1} parent=35 // pred_check_branch
          %191 = sbr.rel (%p189) target = $region40
        $region39: #{tpu_custom_call.1} parent=35 // pred_region
          %s192 = sand.u32 %s69, 1
          %s193 = scalar_lea.sflag [#allocation4], %s192
          %s194 = sand.u32 %s69, 1
          %s195 = smul.addr %s194, 2
          %s196 = scalar_lea.vmem [#allocation5], %s195
          %197 = dma.done %s193, 32
        $region40: #{tpu_custom_call.1} parent=35 // pred_fallthru
          _
      $region36: #{tpu_custom_call.1} parent=5 // pred_fallthru
        _
    $region6: #{tpu_custom_call.1} parent=1 // loop_footer
      %s17 = sadd.s32 1, %s13
    $region7: #{tpu_custom_call.1} parent=1 // loop_footer_branch
      %12 = sbr.rel target = $region3
    $region8: #{tpu_custom_call.1} parent=1 // loop_exit
      _
    %198 = vsyncpa [#allocation3], 1
    %s199 = scalar_lea.sflag [#allocation3], 1
    %200 = vsyncpa %s199, 1
    %201 = vsyncpa [#allocation4], 1
    %s202 = scalar_lea.sflag [#allocation4], 1
    %203 = vsyncpa %s202, 1

</llo_original>
